<compile_context>
chip_gen: v7x
topology: tpu7x:2x2x1
jax: 0.10.0
libtpu: 0.0.40
codegen_flags: <defaults>
</compile_context>

<pallas_src>
import functools
import math

import jax
import jax.numpy as jnp
from jax.experimental import pallas as pl
from jax.experimental.pallas import tpu as pltpu


def _round_up(x: int, m: int) -> int:
    return ((x + m - 1) // m) * m


def _pick_tile(total: int, max_tile: int) -> int:
    """Largest multiple of 128 that divides `total` (a multiple of 128) and
    is <= max_tile."""
    q = total // 128
    best, d = 1, 1
    while d * 128 <= max_tile and d <= q:
        if q % d == 0:
            best = d
        d += 1
    return best * 128


_RESIDENT_SUPPORT_BUDGET = 30 << 20   # safe on v5e/v6e/v7x scoped VMEM
_VMEM_CAP = 44 << 20                  # below v7x's 64 MiB physical VMEM


def _vmem_limit(nbytes: int) -> int:
    return int(min(max(nbytes + (4 << 20), 16 << 20), _VMEM_CAP))


# --------------------------------------------------------------- kernels ----

def support_kernel(x_ref, w_ref, o_ref, acc_ref):
    # support_tile(i) = sum_k X[i-tile, k-tile] @ W[k-tile, :]
    k = pl.program_id(1)

    @pl.when(k == 0)
    def _():
        acc_ref[...] = jnp.zeros_like(acc_ref)

    acc_ref[...] += jnp.dot(
        x_ref[...], w_ref[...], preferred_element_type=jnp.float32
    )

    @pl.when(k == pl.num_programs(1) - 1)
    def _():
        o_ref[...] = acc_ref[...].astype(o_ref.dtype)


def spmm_bias_tiled_kernel(adj_ref, sup_ref, b_ref, o_ref):
    # out_tile(i) = sum_k adj[i-tile, k-tile] @ support[k-tile, :]  (+ bias)
    # Output tile is VMEM-resident across k: accumulate directly into it.
    k = pl.program_id(1)

    @pl.when(k == 0)
    def _():
        o_ref[...] = jnp.zeros_like(o_ref)

    a = adj_ref[...].astype(sup_ref.dtype)          # cast in-kernel, no HBM pre-pass
    o_ref[...] += jnp.dot(a, sup_ref[...], preferred_element_type=jnp.float32)

    @pl.when(k == pl.num_programs(1) - 1)
    def _():
        o_ref[...] += b_ref[...]


def spmm_bias_resident_kernel(adj_ref, sup_ref, b_ref, o_ref, *, tk):
    # Same as above, but `support` is one whole VMEM-resident (Np, Fp) block
    # (constant index_map => fetched from HBM exactly once), sliced by k here.
    k = pl.program_id(1)

    @pl.when(k == 0)
    def _():
        o_ref[...] = jnp.zeros_like(o_ref)

    a = adj_ref[...].astype(sup_ref.dtype)
    off = pl.multiple_of(k * tk, 128)
    o_ref[...] += jnp.dot(
        a, sup_ref[pl.ds(off, tk), :], preferred_element_type=jnp.float32
    )

    @pl.when(k == pl.num_programs(1) - 1)
    def _():
        o_ref[...] += b_ref[...]


# --------------------------------------------------------------- wrapper ----

def graph_convolution(x, adj, weight, bias=None, *,
                      tile_rows=512, tile_k=512,
                      compute_dtype=jnp.bfloat16,
                      resident_support=None):
    """GCN forward: adj @ (x @ weight) + bias.

    x:      [N, in_features]
    adj:    [N, N] dense (row-normalized) adjacency
    weight: [in_features, out_features]
    bias:   [out_features] or None
    compute_dtype: dtype used to stream operands through the MXU
                   (accumulation is always float32).
    resident_support: force/forbid the VMEM-resident support path
                      (None = auto by VMEM budget).
    """
    N, in_f = x.shape
    out_f = weight.shape[1]
    assert adj.shape == (N, N)

    f32 = jnp.float32
    cs = jnp.dtype(compute_dtype).itemsize
    adj_bytes = jnp.dtype(adj.dtype).itemsize

    Np = _round_up(N, 128)                 # padded node count
    Fp = _round_up(out_f, 128)             # lane-dense output width

    # ---- tile plan -----------------------------------------------------
    tm = _pick_tile(Np, min(tile_rows, Np))
    tk = _pick_tile(Np, min(tile_k, Np))
    # Keep >=2 row tiles when the graph allows it, so the "parallel" row axis
    # can be split across the two TensorCores on v7x.
    if Np // tm < 2 and Np >= 256:
        tm = _pick_tile(Np, Np // 2)

    # Kernel-1 reduction tiling over in_features.
    if in_f % 128 == 0:
        tkf = _pick_tile(in_f, 512)
    else:
        tkf = in_f                         # full extent, single reduction step
    nkf = in_f // tkf

    # ---- host-side prep --------------------------------------------------
    # x / weight / bias are the small operands: cast (and row-pad x) host-side.
    x_p = x.astype(compute_dtype)
    if Np != N:
        x_p = jnp.zeros((Np, in_f), compute_dtype).at[:N, :].set(x_p)
    w_p = jnp.zeros((in_f, Fp), compute_dtype).at[:, :out_f].set(
        weight.astype(compute_dtype))
    b_p = jnp.zeros((1, Fp), f32)
    if bias is not None:
        b_p = b_p.at[0, :out_f].set(bias.astype(f32))

    # adj is the dominant O(N^2) operand: no pad+cast pre-pass. Stream it in
    # its stored dtype (cast happens in-kernel); pad only if strictly needed.
    adj_p = adj if Np == N else (
        jnp.zeros((Np, Np), adj.dtype).at[:N, :N].set(adj))

    # ---- kernel 1: support = X @ W (row-tiled, K-tiled over in_features) ----
    k1_vmem = (2 * tm * tkf * cs + 2 * tkf * Fp * cs
               + 2 * tm * Fp * cs + tm * Fp * 4)
    support = pl.pallas_call(
        support_kernel,
        out_shape=jax.ShapeDtypeStruct((Np, Fp), compute_dtype),
        grid_spec=pltpu.PrefetchScalarGridSpec(
            num_scalar_prefetch=0,
            grid=(Np // tm, nkf),
            in_specs=[
                pl.BlockSpec((tm, tkf), lambda i, k: (i, k)),
                pl.BlockSpec((tkf, Fp), lambda i, k: (k, 0)),
            ],
            out_specs=pl.BlockSpec((tm, Fp), lambda i, k: (i, 0)),
            scratch_shapes=[pltpu.VMEM((tm, Fp), jnp.float32)],
        ),
        compiler_params=pltpu.CompilerParams(
            dimension_semantics=("parallel", "arbitrary"),
            vmem_limit_bytes=_vmem_limit(k1_vmem)),
    )(x_p, w_p)

    # ---- kernel 2: out = adj @ support + bias (row-parallel, K-tiled) -------
    resident_bytes = (2 * Np * Fp * cs            # support (counted double-buffered)
                      + 2 * tm * tk * adj_bytes   # adj tile
                      + 2 * tm * Fp * 4)          # output tile
    tiled_bytes = 2 * tm * tk * adj_bytes + 2 * tk * Fp * cs + 2 * tm * Fp * 4
    if resident_support is None:
        resident_support = resident_bytes <= _RESIDENT_SUPPORT_BUDGET

    if resident_support:
        kernel2 = functools.partial(spmm_bias_resident_kernel, tk=tk)
        sup_spec = pl.BlockSpec((Np, Fp), lambda i, k: (0, 0))   # VMEM-resident
        k2_vmem = resident_bytes
    else:
        kernel2 = spmm_bias_tiled_kernel
        sup_spec = pl.BlockSpec((tk, Fp), lambda i, k: (k, 0))
        k2_vmem = tiled_bytes

    out_p = pl.pallas_call(
        kernel2,
        out_shape=jax.ShapeDtypeStruct((Np, Fp), jnp.float32),
        grid_spec=pltpu.PrefetchScalarGridSpec(
            num_scalar_prefetch=0,
            grid=(Np // tm, Np // tk),
            in_specs=[
                pl.BlockSpec((tm, tk), lambda i, k: (i, k)),   # adj (stored dtype)
                sup_spec,                                      # support
                pl.BlockSpec((1, Fp), lambda i, k: (0, 0)),    # bias
            ],
            out_specs=pl.BlockSpec((tm, Fp), lambda i, k: (i, 0)),
        ),
        compiler_params=pltpu.CompilerParams(
            dimension_semantics=("parallel", "arbitrary"),
            vmem_limit_bytes=_vmem_limit(k2_vmem)),
    )(adj_p, support, b_p)

    return out_p[:N, :out_f]


# ------------------------------------------------------------------ demo ----

def _reference(x, adj, weight, bias):
    out = adj @ (x @ weight)
    if bias is not None:
        out = out + bias[None, :]
    return out


def _make_inputs(key, N, in_f, out_f):
    k_x, k_adj, k_w, k_b = jax.random.split(key, 4)
    x = jax.random.normal(k_x, (N, in_f), dtype=jnp.float32)
    adj = (jax.random.uniform(k_adj, (N, N)) < 0.1).astype(jnp.float32)
    adj = adj + jnp.eye(N, dtype=jnp.float32)               # self-loops
    deg = jnp.maximum(adj.sum(axis=1, keepdims=True), 1.0)
    adj = adj / deg                                          # row-normalize
    # reset_parameters(): uniform(-stdv, stdv), stdv = 1/sqrt(out_features)
    stdv = 1.0 / math.sqrt(out_f)
    weight = jax.random.uniform(k_w, (in_f, out_f), minval=-stdv, maxval=stdv,
                                dtype=jnp.float32)
    bias = jax.random.uniform(k_b, (out_f,), minval=-stdv, maxval=stdv,
                              dtype=jnp.float32)
    return x, adj, weight, bias


if __name__ == "__main__":
    key = jax.random.PRNGKey(0)
    keys = jax.random.split(key, 3)

    # --- primary (module-sized) example: N=128, 16 -> 32 features -----------
    x, adj, w, b = _make_inputs(keys[0], 128, 16, 32)
    ref = _reference(x, adj, w, b)

    out_f32 = jax.block_until_ready(
        graph_convolution(x, adj, w, b, compute_dtype=jnp.float32))
    assert out_f32.shape == ref.shape
    assert jnp.allclose(out_f32, ref, atol=1e-4, rtol=1e-4), \
        "float32 path mismatch vs reference"

    out_bf16 = jax.block_until_ready(graph_convolution(x, adj, w, b))
    assert out_bf16.shape == ref.shape
    assert jnp.allclose(out_bf16, ref, atol=3e-2, rtol=3e-2), \
        "bf16 path mismatch vs reference"

    # --- multi-tile path: several row tiles + K tiles, resident support -----
    x, adj, w, b = _make_inputs(keys[1], 640, 96, 50)
    ref = _reference(x, adj, w, b)
    out = jax.block_until_ready(
        graph_convolution(x, adj, w, b, compute_dtype=jnp.float32,
                          tile_rows=128, tile_k=128))
    assert out.shape == ref.shape
    assert jnp.allclose(out, ref, atol=2e-4, rtol=2e-4), \
        "multi-tile resident-support path mismatch"

    # same problem through the K-blocked support fallback (forced)
    out = jax.block_until_ready(
        graph_convolution(x, adj, w, b, compute_dtype=jnp.float32,
                          tile_rows=128, tile_k=128, resident_support=False))
    assert jnp.allclose(out, ref, atol=2e-4, rtol=2e-4), \
        "multi-tile tiled-support path mismatch"

    # --- padded path (N not a multiple of 128), no bias ---------------------
    x, adj, w, _ = _make_inputs(keys[2], 200, 33, 7)
    ref = _reference(x, adj, w, None)
    out = jax.block_until_ready(
        graph_convolution(x, adj, w, None, compute_dtype=jnp.float32))
    assert out.shape == ref.shape
    assert jnp.allclose(out, ref, atol=2e-4, rtol=2e-4), \
        "padded/no-bias path mismatch"

    print("KERNEL_OK")
</pallas_src>

<mosaic_0001>
module attributes {stable_mosaic.version = 11 : i64} {
  func.func @support_kernel(%arg0: i32, %arg1: i32, %arg2: memref<128x16xf32, #tpu.memory_space<vmem>>, %arg3: memref<16x128xf32, #tpu.memory_space<vmem>>, %arg4: memref<128x128xf32, #tpu.memory_space<vmem>>, %arg5: memref<128x128xf32, #tpu.memory_space<vmem>>) attributes {dimension_semantics = [#tpu.dimension_semantics<parallel>, #tpu.dimension_semantics<arbitrary>], iteration_bounds = array<i64: 1, 1>, scalar_prefetch = 0 : i64, scratch_operands = 1 : i64, tpu.core_type = #tpu.core_type<tc>, window_params = [{transform_indices = @transform_0, window_bounds = array<i64: 128, 16>}, {transform_indices = @transform_1, window_bounds = array<i64: 16, 128>}, {transform_indices = @transform_2, window_bounds = array<i64: 128, 128>}]} {
    %c0_i32 = arith.constant 0 : i32
    %0 = arith.cmpi eq, %arg1, %c0_i32 : i32
    %1 = arith.extui %0 : i1 to i32
    %c0_i32_0 = arith.constant 0 : i32
    %2 = arith.cmpi ne, %1, %c0_i32_0 : i32
    scf.if %2 {
      %cst_10 = arith.constant 0.000000e+00 : f32
      %12 = vector.broadcast %cst_10 : f32 to vector<128x128xf32>
      %c0_11 = arith.constant 0 : index
      %c0_12 = arith.constant 0 : index
      %13 = vector.load %arg5[%c0_11, %c0_12] : memref<128x128xf32, #tpu.memory_space<vmem>>, vector<128x128xf32>
      tpu.vector_store %arg5[%c0_11, %c0_12], %12 {strides = array<i32>} : memref<128x128xf32, #tpu.memory_space<vmem>>, vector<128x128xf32>,
    } else {
    }
    %c0 = arith.constant 0 : index
    %c0_1 = arith.constant 0 : index
    %3 = vector.load %arg5[%c0, %c0_1] : memref<128x128xf32, #tpu.memory_space<vmem>>, vector<128x128xf32>
    %c0_2 = arith.constant 0 : index
    %c0_3 = arith.constant 0 : index
    %4 = vector.load %arg2[%c0_2, %c0_3] : memref<128x16xf32, #tpu.memory_space<vmem>>, vector<128x16xf32>
    %c0_4 = arith.constant 0 : index
    %c0_5 = arith.constant 0 : index
    %5 = vector.load %arg3[%c0_4, %c0_5] : memref<16x128xf32, #tpu.memory_space<vmem>>, vector<16x128xf32>
    %cst = arith.constant dense<0.000000e+00> : vector<128x128xf32>
    %6 = tpu.matmul %4, %5, %cst {dimension_numbers = #tpu.dot_dimension_numbers<[1], [0], [0], [1], [0, 0, 1, 1], [], []>} : vector<128x16xf32>, vector<16x128xf32>, vector<128x128xf32> -> vector<128x128xf32>
    %7 = arith.addf %3, %6 : vector<128x128xf32>
    %c0_6 = arith.constant 0 : index
    %c0_7 = arith.constant 0 : index
    %8 = vector.load %arg5[%c0_6, %c0_7] : memref<128x128xf32, #tpu.memory_space<vmem>>, vector<128x128xf32>
    tpu.vector_store %arg5[%c0_6, %c0_7], %7 {strides = array<i32>} : memref<128x128xf32, #tpu.memory_space<vmem>>, vector<128x128xf32>,
    %c0_i32_8 = arith.constant 0 : i32
    %9 = arith.cmpi eq, %arg1, %c0_i32_8 : i32
    %10 = arith.extui %9 : i1 to i32
    %c0_i32_9 = arith.constant 0 : i32
    %11 = arith.cmpi ne, %10, %c0_i32_9 : i32
    scf.if %11 {
      %c0_10 = arith.constant 0 : index
      %c0_11 = arith.constant 0 : index
      %12 = vector.load %arg5[%c0_10, %c0_11] : memref<128x128xf32, #tpu.memory_space<vmem>>, vector<128x128xf32>
      %c0_12 = arith.constant 0 : index
      %c0_13 = arith.constant 0 : index
      %13 = vector.load %arg4[%c0_12, %c0_13] : memref<128x128xf32, #tpu.memory_space<vmem>>, vector<128x128xf32>
      tpu.vector_store %arg4[%c0_12, %c0_13], %12 {strides = array<i32>} : memref<128x128xf32, #tpu.memory_space<vmem>>, vector<128x128xf32>,
    } else {
    }
    return
  }
  func.func @transform_0(%arg0: i32, %arg1: i32) -> (i32, i32) {
    %c0_i32 = arith.constant 0 : i32
    return %arg0, %arg1 : i32, i32
  }
  func.func @transform_1(%arg0: i32, %arg1: i32) -> (i32, i32) {
    %c0_i32 = arith.constant 0 : i32
    %c0_i32_0 = arith.constant 0 : i32
    return %arg1, %c0_i32 : i32, i32
  }
  func.func @transform_2(%arg0: i32, %arg1: i32) -> (i32, i32) {
    %c0_i32 = arith.constant 0 : i32
    %c0_i32_0 = arith.constant 0 : i32
    return %arg0, %c0_i32 : i32, i32
  }
}

</mosaic_0001>

<llo_original>
// kernel: tpu_custom_call.1
$region0: #{tpu_custom_call.1}
  #allocation0 [shape = 'u32[]', space=smem, size = 0x4, offset = 0x4, fixed_abs, tag = 'smem constant byte address 0x4 - core index']
  #allocation1 [shape = 'u32[144,128]{1,0:T(1,128)}', space=vmem, size = 0x12000, scoped, tag = 'internal scratch']
  #allocation2 [shape = 'f32[128,128]{1,0:T(8,128)}', space=vmem, size = 0x10000, scoped, tag = 'scratch operand']
  %s0 = inlined_call_operand.vmem [shape: f32[128,16], index: 0, kind: input, shape index: {}]
  %s1 = inlined_call_operand.vmem [shape: f32[16,128], index: 1, kind: input, shape index: {}]
  %s2 = inlined_call_operand.hbm [shape: f32[128,128], index: 2, kind: output, shape index: {}]
  %s3 = sld [smem:[#allocation0]]
  $region26: #{tpu_custom_call.1} parent=0
    _
  %s5 = ssub.s32 1, %s3
  %s6 = scalar_select 0, %s5, %s3
  $region1: #{tpu_custom_call.1} parent=0
    #allocation3 [shape = 'u8[65536]{0}', space=vmem, size = 0x10000, scoped, tag = 'output window, operand 0, single buffered']
    #allocation4 [shape = 's32[1]{0}', space=sflag, size = 0x4, scoped, tag = 'scoped memory for tpu_custom_call.1']
    %7 = vsyncpa [#allocation4], 0
    // Predicated region
    $region2: #{tpu_custom_call.1} parent=1 // pred_check
      _
    $region3: #{tpu_custom_call.1} parent=1 // pred_check_branch
      %9 = sbr.rel (0) target = $region5
    $region4: #{tpu_custom_call.1} parent=1 // pred_region
      _
    $region5: #{tpu_custom_call.1} parent=1 // pred_fallthru
      _
    // Predicated region
    $region6: #{tpu_custom_call.1} parent=1 // pred_check
      _
    $region7: #{tpu_custom_call.1} parent=1 // pred_check_branch
      %11 = sbr.rel (0) target = $region9
    $region8: #{tpu_custom_call.1} parent=1 // pred_region
      _
    $region9: #{tpu_custom_call.1} parent=1 // pred_fallthru
      _
    %p12 = scmp.eq.s32.totalorder 0, 0
    // Predicated region
    $region10: #{tpu_custom_call.1} parent=1 // pred_check
      %p13 = pneg %p12
    $region11: #{tpu_custom_call.1} parent=1 // pred_check_branch
      %15 = sbr.rel (%p13) target = $region13
    $region12: #{tpu_custom_call.1} parent=1 // pred_region
      %16 = vst [vmem:[#allocation2] sm:$0xff] 0.0
      %17 = vst [vmem:[#allocation2 + $0x8] sm:$0xff] 0.0
      %18 = vst [vmem:[#allocation2 + $0x10] sm:$0xff] 0.0
      %19 = vst [vmem:[#allocation2 + $0x18] sm:$0xff] 0.0
      %20 = vst [vmem:[#allocation2 + $0x20] sm:$0xff] 0.0
      %21 = vst [vmem:[#allocation2 + $0x28] sm:$0xff] 0.0
      %22 = vst [vmem:[#allocation2 + $0x30] sm:$0xff] 0.0
      %23 = vst [vmem:[#allocation2 + $0x38] sm:$0xff] 0.0
      %24 = vst [vmem:[#allocation2 + $0x40] sm:$0xff] 0.0
      %25 = vst [vmem:[#allocation2 + $0x48] sm:$0xff] 0.0
      %26 = vst [vmem:[#allocation2 + $0x50] sm:$0xff] 0.0
      %27 = vst [vmem:[#allocation2 + $0x58] sm:$0xff] 0.0
      %28 = vst [vmem:[#allocation2 + $0x60] sm:$0xff] 0.0
      %29 = vst [vmem:[#allocation2 + $0x68] sm:$0xff] 0.0
      %30 = vst [vmem:[#allocation2 + $0x70] sm:$0xff] 0.0
      %31 = vst [vmem:[#allocation2 + $0x78] sm:$0xff] 0.0
    $region13: #{tpu_custom_call.1} parent=1 // pred_fallthru
      _
    %v32 = vld [vmem:[#allocation2] sm:$0xff]
    %v33 = vld [vmem:[#allocation2 + $0x8] sm:$0xff]
    %v34 = vld [vmem:[#allocation2 + $0x10] sm:$0xff]
    %v35 = vld [vmem:[#allocation2 + $0x18] sm:$0xff]
    %v36 = vld [vmem:[#allocation2 + $0x20] sm:$0xff]
    %v37 = vld [vmem:[#allocation2 + $0x28] sm:$0xff]
    %v38 = vld [vmem:[#allocation2 + $0x30] sm:$0xff]
    %v39 = vld [vmem:[#allocation2 + $0x38] sm:$0xff]
    %v40 = vld [vmem:[#allocation2 + $0x40] sm:$0xff]
    %v41 = vld [vmem:[#allocation2 + $0x48] sm:$0xff]
    %v42 = vld [vmem:[#allocation2 + $0x50] sm:$0xff]
    %v43 = vld [vmem:[#allocation2 + $0x58] sm:$0xff]
    %v44 = vld [vmem:[#allocation2 + $0x60] sm:$0xff]
    %v45 = vld [vmem:[#allocation2 + $0x68] sm:$0xff]
    %v46 = vld [vmem:[#allocation2 + $0x70] sm:$0xff]
    %v47 = vld [vmem:[#allocation2 + $0x78] sm:$0xff]
    %v48 = vld [vmem:[%s0] sm:$0xff]
    %v49 = vld [vmem:[%s0 + $0x8] sm:$0xff]
    %v50 = vld [vmem:[%s0 + $0x10] sm:$0xff]
    %v51 = vld [vmem:[%s0 + $0x18] sm:$0xff]
    %v52 = vld [vmem:[%s0 + $0x20] sm:$0xff]
    %v53 = vld [vmem:[%s0 + $0x28] sm:$0xff]
    %v54 = vld [vmem:[%s0 + $0x30] sm:$0xff]
    %v55 = vld [vmem:[%s0 + $0x38] sm:$0xff]
    %v56 = vld [vmem:[%s0 + $0x40] sm:$0xff]
    %v57 = vld [vmem:[%s0 + $0x48] sm:$0xff]
    %v58 = vld [vmem:[%s0 + $0x50] sm:$0xff]
    %v59 = vld [vmem:[%s0 + $0x58] sm:$0xff]
    %v60 = vld [vmem:[%s0 + $0x60] sm:$0xff]
    %v61 = vld [vmem:[%s0 + $0x68] sm:$0xff]
    %v62 = vld [vmem:[%s0 + $0x70] sm:$0xff]
    %v63 = vld [vmem:[%s0 + $0x78] sm:$0xff]
    %v64 = vld [vmem:[%s1] sm:$0xff]
    %v65 = vld [vmem:[%s1 + $0x8] sm:$0xff]
    %vm66 = vcmask 130048
    %v68 = vsel %vm66, %v48, 0
    %v71 = vsel %vm66, %v49, 0
    %v74 = vsel %vm66, %v50, 0
    %v77 = vsel %vm66, %v51, 0
    %v80 = vsel %vm66, %v52, 0
    %v83 = vsel %vm66, %v53, 0
    %v86 = vsel %vm66, %v54, 0
    %v89 = vsel %vm66, %v55, 0
    %v92 = vsel %vm66, %v56, 0
    %v95 = vsel %vm66, %v57, 0
    %v98 = vsel %vm66, %v58, 0
    %v101 = vsel %vm66, %v59, 0
    %v104 = vsel %vm66, %v60, 0
    %v107 = vsel %vm66, %v61, 0
    %v110 = vsel %vm66, %v62, 0
    %v113 = vsel %vm66, %v63, 0
    %115 = vmatprep.subr.mxu0 0.0
    %116 = vmatpush1.msra.mxu0 %v64
    %117 = vmatprep.subr.mxu0 0.0
    %118 = vmatpush1.msra.mxu0 %v65
    %119 = vmatprep.subr.mxu0 0.0
    %120 = vmatpush1.msra.mxu0 0.0
    %121 = vmatprep.subr.mxu0 0.0
    %122 = vmatpush1.msra.mxu0 0.0
    %123 = vmatprep.subr.mxu0 0.0
    %124 = vmatpush1.msra.mxu0 0.0
    %125 = vmatprep.subr.mxu0 0.0
    %126 = vmatpush1.msra.mxu0 0.0
    %127 = vmatprep.subr.mxu0 0.0
    %128 = vmatpush1.msra.mxu0 0.0
    %129 = vmatprep.subr.mxu0 0.0
    %130 = vmatpush1.msra.mxu0 0.0
    %131 = vmatprep.subr.mxu0 0.0
    %132 = vmatpush1.msra.mxu0 0.0
    %133 = vmatprep.subr.mxu0 0.0
    %134 = vmatpush1.msra.mxu0 0.0
    %135 = vmatprep.subr.mxu0 0.0
    %136 = vmatpush1.msra.mxu0 0.0
    %137 = vmatprep.subr.mxu0 0.0
    %138 = vmatpush1.msra.mxu0 0.0
    %139 = vmatprep.subr.mxu0 0.0
    %140 = vmatpush1.msra.mxu0 0.0
    %141 = vmatprep.subr.mxu0 0.0
    %142 = vmatpush1.msra.mxu0 0.0
    %143 = vmatprep.subr.mxu0 0.0
    %144 = vmatpush1.msra.mxu0 0.0
    %145 = vmatprep.subr.mxu0 0.0
    %146 = vmatpush1.msra.mxu0 0.0
    %147 = vmatprep.subr.mxu0 0.0
    %148 = vmatpush1.msra.mxu0 0.0
    %149 = vmatprep.subr.mxu0 0.0
    %150 = vmatpush1.msra.mxu0 0.0
    %151 = vmatprep.subr.mxu0 0.0
    %152 = vmatpush1.msra.mxu0 0.0
    %153 = vmatprep.subr.mxu0 0.0
    %154 = vmatpush1.msra.mxu0 0.0
    %155 = vmatprep.subr.mxu0 0.0
    %156 = vmatpush1.msra.mxu0 0.0
    %157 = vmatprep.subr.mxu0 0.0
    %158 = vmatpush1.msra.mxu0 0.0
    %159 = vmatprep.subr.mxu0 0.0
    %160 = vmatpush1.msra.mxu0 0.0
    %161 = vmatprep.subr.mxu0 0.0
    %162 = vmatpush1.msra.mxu0 0.0
    %163 = vmatprep.subr.mxu0 0.0
    %164 = vmatpush1.msra.mxu0 0.0
    %165 = vmatprep.subr.mxu0 0.0
    %166 = vmatpush1.msra.mxu0 0.0
    %167 = vmatprep.subr.mxu0 0.0
    %168 = vmatpush1.msra.mxu0 0.0
    %169 = vmatprep.subr.mxu0 0.0
    %170 = vmatpush1.msra.mxu0 0.0
    %171 = vmatprep.subr.mxu0 0.0
    %172 = vmatpush1.msra.mxu0 0.0
    %173 = vmatprep.subr.mxu0 0.0
    %174 = vmatpush1.msra.mxu0 0.0
    %175 = vmatprep.subr.mxu0 0.0
    %176 = vmatpush1.msra.mxu0 0.0
    %177 = vmatprep.subr.mxu0 0.0
    %178 = vmatpush1.msra.mxu0 0.0
    %179 = vmatprep.mubr.f32.mxu0 0.0
    %180 = vmatmul.mubr.f32.gmra.mrb[0].mxu0 %v68
    %v181 = vpop.f32.mrb[0].mxu0
    %v182 = vadd.f32 0.0, %v181
    %v183 = vpop.f32.mrb[0].mxu0
    %184 = vmatprep.mubr.f32.mxu0 0.0
    %185 = vmatmul.mubr.f32.gmra.mrb[0].mxu0 %v71
    %v186 = vpop.f32.mrb[0].mxu0
    %v187 = vadd.f32 0.0, %v186
    %v188 = vpop.f32.mrb[0].mxu0
    %189 = vmatprep.mubr.f32.mxu0 0.0
    %190 = vmatmul.mubr.f32.gmra.mrb[0].mxu0 %v74
    %v191 = vpop.f32.mrb[0].mxu0
    %v192 = vadd.f32 0.0, %v191
    %v193 = vpop.f32.mrb[0].mxu0
    %194 = vmatprep.mubr.f32.mxu0 0.0
    %195 = vmatmul.mubr.f32.gmra.mrb[0].mxu0 %v77
    %v196 = vpop.f32.mrb[0].mxu0
    %v197 = vadd.f32 0.0, %v196
    %v198 = vpop.f32.mrb[0].mxu0
    %199 = vmatprep.mubr.f32.mxu0 0.0
    %200 = vmatmul.mubr.f32.gmra.mrb[0].mxu0 %v80
    %v201 = vpop.f32.mrb[0].mxu0
    %v202 = vadd.f32 0.0, %v201
    %v203 = vpop.f32.mrb[0].mxu0
    %204 = vmatprep.mubr.f32.mxu0 0.0
    %205 = vmatmul.mubr.f32.gmra.mrb[0].mxu0 %v83
    %v206 = vpop.f32.mrb[0].mxu0
    %v207 = vadd.f32 0.0, %v206
    %v208 = vpop.f32.mrb[0].mxu0
    %209 = vmatprep.mubr.f32.mxu0 0.0
    %210 = vmatmul.mubr.f32.gmra.mrb[0].mxu0 %v86
    %v211 = vpop.f32.mrb[0].mxu0
    %v212 = vadd.f32 0.0, %v211
    %v213 = vpop.f32.mrb[0].mxu0
    %214 = vmatprep.mubr.f32.mxu0 0.0
    %215 = vmatmul.mubr.f32.gmra.mrb[0].mxu0 %v89
    %v216 = vpop.f32.mrb[0].mxu0
    %v217 = vadd.f32 0.0, %v216
    %v218 = vpop.f32.mrb[0].mxu0
    %219 = vmatprep.mubr.f32.mxu0 0.0
    %220 = vmatmul.mubr.f32.gmra.mrb[0].mxu0 %v92
    %v221 = vpop.f32.mrb[0].mxu0
    %v222 = vadd.f32 0.0, %v221
    %v223 = vpop.f32.mrb[0].mxu0
    %224 = vmatprep.mubr.f32.mxu0 0.0
    %225 = vmatmul.mubr.f32.gmra.mrb[0].mxu0 %v95
    %v226 = vpop.f32.mrb[0].mxu0
    %v227 = vadd.f32 0.0, %v226
    %v228 = vpop.f32.mrb[0].mxu0
    %229 = vmatprep.mubr.f32.mxu0 0.0
    %230 = vmatmul.mubr.f32.gmra.mrb[0].mxu0 %v98
    %v231 = vpop.f32.mrb[0].mxu0
    %v232 = vadd.f32 0.0, %v231
    %v233 = vpop.f32.mrb[0].mxu0
    %234 = vmatprep.mubr.f32.mxu0 0.0
    %235 = vmatmul.mubr.f32.gmra.mrb[0].mxu0 %v101
    %v236 = vpop.f32.mrb[0].mxu0
    %v237 = vadd.f32 0.0, %v236
    %v238 = vpop.f32.mrb[0].mxu0
    %239 = vmatprep.mubr.f32.mxu0 0.0
    %240 = vmatmul.mubr.f32.gmra.mrb[0].mxu0 %v104
    %v241 = vpop.f32.mrb[0].mxu0
    %v242 = vadd.f32 0.0, %v241
    %v243 = vpop.f32.mrb[0].mxu0
    %244 = vmatprep.mubr.f32.mxu0 0.0
    %245 = vmatmul.mubr.f32.gmra.mrb[0].mxu0 %v107
    %v246 = vpop.f32.mrb[0].mxu0
    %v247 = vadd.f32 0.0, %v246
    %v248 = vpop.f32.mrb[0].mxu0
    %249 = vmatprep.mubr.f32.mxu0 0.0
    %250 = vmatmul.mubr.f32.gmra.mrb[0].mxu0 %v110
    %v251 = vpop.f32.mrb[0].mxu0
    %v252 = vadd.f32 0.0, %v251
    %v253 = vpop.f32.mrb[0].mxu0
    %254 = vmatprep.mubr.f32.mxu0 0.0
    %255 = vmatmul.mubr.f32.gmra.mrb[0].mxu0 %v113
    %v256 = vpop.f32.mrb[0].mxu0
    %v257 = vadd.f32 0.0, %v256
    %v258 = vpop.f32.mrb[0].mxu0
    %259 = vdwg.mxu0
    %v260 = vadd.f32 %v32, %v182
    %v261 = vadd.f32 %v33, %v187
    %v262 = vadd.f32 %v34, %v192
    %v263 = vadd.f32 %v35, %v197
    %v264 = vadd.f32 %v36, %v202
    %v265 = vadd.f32 %v37, %v207
    %v266 = vadd.f32 %v38, %v212
    %v267 = vadd.f32 %v39, %v217
    %v268 = vadd.f32 %v40, %v222
    %v269 = vadd.f32 %v41, %v227
    %v270 = vadd.f32 %v42, %v232
    %v271 = vadd.f32 %v43, %v237
    %v272 = vadd.f32 %v44, %v242
    %v273 = vadd.f32 %v45, %v247
    %v274 = vadd.f32 %v46, %v252
    %v275 = vadd.f32 %v47, %v257
    %276 = vst [vmem:[#allocation2] sm:$0xff] %v260
    %277 = vst [vmem:[#allocation2 + $0x8] sm:$0xff] %v261
    %278 = vst [vmem:[#allocation2 + $0x10] sm:$0xff] %v262
    %279 = vst [vmem:[#allocation2 + $0x18] sm:$0xff] %v263
    %280 = vst [vmem:[#allocation2 + $0x20] sm:$0xff] %v264
    %281 = vst [vmem:[#allocation2 + $0x28] sm:$0xff] %v265
    %282 = vst [vmem:[#allocation2 + $0x30] sm:$0xff] %v266
    %283 = vst [vmem:[#allocation2 + $0x38] sm:$0xff] %v267
    %284 = vst [vmem:[#allocation2 + $0x40] sm:$0xff] %v268
    %285 = vst [vmem:[#allocation2 + $0x48] sm:$0xff] %v269
    %286 = vst [vmem:[#allocation2 + $0x50] sm:$0xff] %v270
    %287 = vst [vmem:[#allocation2 + $0x58] sm:$0xff] %v271
    %288 = vst [vmem:[#allocation2 + $0x60] sm:$0xff] %v272
    %289 = vst [vmem:[#allocation2 + $0x68] sm:$0xff] %v273
    %290 = vst [vmem:[#allocation2 + $0x70] sm:$0xff] %v274
    %291 = vst [vmem:[#allocation2 + $0x78] sm:$0xff] %v275
    // Predicated region
    $region14: #{tpu_custom_call.1} parent=1 // pred_check
      %p292 = pneg %p12
    $region15: #{tpu_custom_call.1} parent=1 // pred_check_branch
      %294 = sbr.rel (%p292) target = $region17
    $region16: #{tpu_custom_call.1} parent=1 // pred_region
      %v295 = vld [vmem:[#allocation2] sm:$0xff]
      %v296 = vld [vmem:[#allocation2 + $0x8] sm:$0xff]
      %v297 = vld [vmem:[#allocation2 + $0x10] sm:$0xff]
      %v298 = vld [vmem:[#allocation2 + $0x18] sm:$0xff]
      %v299 = vld [vmem:[#allocation2 + $0x20] sm:$0xff]
      %v300 = vld [vmem:[#allocation2 + $0x28] sm:$0xff]
      %v301 = vld [vmem:[#allocation2 + $0x30] sm:$0xff]
      %v302 = vld [vmem:[#allocation2 + $0x38] sm:$0xff]
      %v303 = vld [vmem:[#allocation2 + $0x40] sm:$0xff]
      %v304 = vld [vmem:[#allocation2 + $0x48] sm:$0xff]
      %v305 = vld [vmem:[#allocation2 + $0x50] sm:$0xff]
      %v306 = vld [vmem:[#allocation2 + $0x58] sm:$0xff]
      %v307 = vld [vmem:[#allocation2 + $0x60] sm:$0xff]
      %v308 = vld [vmem:[#allocation2 + $0x68] sm:$0xff]
      %v309 = vld [vmem:[#allocation2 + $0x70] sm:$0xff]
      %v310 = vld [vmem:[#allocation2 + $0x78] sm:$0xff]
      %311 = vst [vmem:[#allocation3] sm:$0xff] %v295
      %312 = vst [vmem:[#allocation3 + $0x8] sm:$0xff] %v296
      %313 = vst [vmem:[#allocation3 + $0x10] sm:$0xff] %v297
      %314 = vst [vmem:[#allocation3 + $0x18] sm:$0xff] %v298
      %315 = vst [vmem:[#allocation3 + $0x20] sm:$0xff] %v299
      %316 = vst [vmem:[#allocation3 + $0x28] sm:$0xff] %v300
      %317 = vst [vmem:[#allocation3 + $0x30] sm:$0xff] %v301
      %318 = vst [vmem:[#allocation3 + $0x38] sm:$0xff] %v302
      %319 = vst [vmem:[#allocation3 + $0x40] sm:$0xff] %v303
      %320 = vst [vmem:[#allocation3 + $0x48] sm:$0xff] %v304
      %321 = vst [vmem:[#allocation3 + $0x50] sm:$0xff] %v305
      %322 = vst [vmem:[#allocation3 + $0x58] sm:$0xff] %v306
      %323 = vst [vmem:[#allocation3 + $0x60] sm:$0xff] %v307
      %324 = vst [vmem:[#allocation3 + $0x68] sm:$0xff] %v308
      %325 = vst [vmem:[#allocation3 + $0x70] sm:$0xff] %v309
      %326 = vst [vmem:[#allocation3 + $0x78] sm:$0xff] %v310
    $region17: #{tpu_custom_call.1} parent=1 // pred_fallthru
      _
    // Predicated region
    $region18: #{tpu_custom_call.1} parent=1 // pred_check
      _
    $region19: #{tpu_custom_call.1} parent=1 // pred_check_branch
      %328 = sbr.rel (0) target = $region21
    $region20: #{tpu_custom_call.1} parent=1 // pred_region
      %s330 = ssub.s32 2048, 2048
      %331 = vsyncadd [#allocation4], %s330
      %s332 = sshll.u32 [#allocation3], 4
      %s333 = int_to_ptr.vmem [resolvable:$true] %s332
      %338 = dma.vmem_to_hbm [thread:$0]  %s333, 2048, %s2, [#allocation4], 128, 128, 8
    $region21: #{tpu_custom_call.1} parent=1 // pred_fallthru
      _
    // Predicated region
    $region22: #{tpu_custom_call.1} parent=1 // pred_check
      _
    $region23: #{tpu_custom_call.1} parent=1 // pred_check_branch
      %340 = sbr.rel (0) target = $region25
    $region24: #{tpu_custom_call.1} parent=1 // pred_region
      %341 = dma.done [#allocation4], 2048
    $region25: #{tpu_custom_call.1} parent=1 // pred_fallthru
      _
    %342 = vsyncpa [#allocation4], 1

</llo_original>
